<compile_context>
chip_gen: v5e
topology: v5e:2x2
jax: 0.10.0
libtpu: 0.0.40
codegen_flags: <defaults>
</compile_context>

<pallas_src>
import functools

import jax
import jax.numpy as jnp
from jax import lax
from jax.experimental import pallas as pl
from jax.experimental.pallas import tpu as pltpu

_EPS = 1e-7
_LANES = 128
_SUBLANES = 8
_BLOCK_ROWS_MAX = 2048   # (2048,128) f32 = 1 MiB per input per grid step
_NUM_SPLITS = 2          # "parallel" leading grid axis (2 TCs on v7x)


def _ce_cut_kernel(y_pred_ref, y_true_ref, out_ref,
                   sum_pos_acc, cnt_pos_acc, sum_neg_acc, cnt_neg_acc,
                   *, n, block_rows, steps_per_split):
    """Accumulate masked BCE pos/neg sums & counts into VMEM vector partials.

    out block (1, 4, 8, 128) = [sum_pos, cnt_pos, sum_neg, cnt_neg] partial
    tiles for this split; combined in the wrapper.
    """
    c = pl.program_id(0)   # split index ("parallel")
    i = pl.program_id(1)   # streaming step within the split ("arbitrary")

    @pl.when(i == 0)
    def _init():
        sum_pos_acc[...] = jnp.zeros_like(sum_pos_acc)
        cnt_pos_acc[...] = jnp.zeros_like(cnt_pos_acc)
        sum_neg_acc[...] = jnp.zeros_like(sum_neg_acc)
        cnt_neg_acc[...] = jnp.zeros_like(cnt_neg_acc)

    # Logical (unclamped) first row of this block — used only for masking, so
    # fully out-of-range blocks (clamped in the index_map) contribute nothing.
    row0 = (c * steps_per_split + i) * block_rows
    local_idx = (lax.broadcasted_iota(jnp.int32, (block_rows, _LANES), 0) * _LANES
                 + lax.broadcasted_iota(jnp.int32, (block_rows, _LANES), 1))
    mask = local_idx < (n - row0 * _LANES)

    p = y_pred_ref[...].astype(jnp.float32)
    y = y_true_ref[...].astype(jnp.float32)
    # Sanitize the padded / undefined tail before the transcendentals so
    # garbage (possibly NaN bits) cannot leak through 0 * NaN.
    p = jnp.where(mask, p, 0.5)
    y = jnp.where(mask, y, 0.0)
    p = jnp.clip(p, _EPS, 1.0 - _EPS)

    # Elementwise binary cross entropy (EUP logs + VPU fma).
    losses = -(y * jnp.log(p) + (1.0 - y) * jnp.log(1.0 - p))

    v = mask.astype(jnp.float32)
    pos = jnp.where(y >= 0.5, v, 0.0)
    neg = v - pos

    def _tile_sum(x):
        # (block_rows, 128) -> (8, 128): vreg-wise adds on the VPU, no XLU.
        return jnp.sum(x.reshape(block_rows // _SUBLANES, _SUBLANES, _LANES),
                       axis=0)

    sum_pos_acc[...] += _tile_sum(losses * pos)
    cnt_pos_acc[...] += _tile_sum(pos)
    sum_neg_acc[...] += _tile_sum(losses * neg)
    cnt_neg_acc[...] += _tile_sum(neg)

    @pl.when(i == pl.num_programs(1) - 1)
    def _finalize():
        out_ref[0, 0, :, :] = sum_pos_acc[...]
        out_ref[0, 1, :, :] = cnt_pos_acc[...]
        out_ref[0, 2, :, :] = sum_neg_acc[...]
        out_ref[0, 3, :, :] = cnt_neg_acc[...]


@jax.jit
def cross_entropy_cut(y_pred, y_true):
    """Pallas equivalent of CrossEntropy_Cut.forward -> scalar loss (f32)."""
    yp = jnp.ravel(y_pred)
    yt = jnp.ravel(y_true)
    n = yp.shape[0]  # static under jit

    # Pad only as much as the (rows, 128) view requires (multiple of 128 and
    # at least one (8,128) tile). For typical NCHW sizes this is a no-op.
    padded = max(pl.cdiv(n, _LANES) * _LANES, _SUBLANES * _LANES)
    pad = padded - n
    if pad:
        yp = jnp.pad(yp, (0, pad))
        yt = jnp.pad(yt, (0, pad))
    rows = padded // _LANES

    yp2 = yp.reshape(rows, _LANES)
    yt2 = yt.reshape(rows, _LANES)

    # Block rows: multiple of 8, never larger than the array (rows >= 8 here).
    block_rows = min(_BLOCK_ROWS_MAX, (rows // _SUBLANES) * _SUBLANES)
    steps_total = pl.cdiv(rows, block_rows)
    steps_per_split = pl.cdiv(steps_total, _NUM_SPLITS)
    max_block = steps_total - 1

    def in_index_map(c, i):
        # Clamp so the DMA never targets a fully out-of-range block; the
        # kernel masks such blocks to zero via the unclamped logical index.
        return (jnp.minimum(c * steps_per_split + i, max_block), 0)

    in_spec = pl.BlockSpec((block_rows, _LANES), in_index_map)

    partials = pl.pallas_call(
        functools.partial(_ce_cut_kernel, n=n, block_rows=block_rows,
                          steps_per_split=steps_per_split),
        out_shape=jax.ShapeDtypeStruct((_NUM_SPLITS, 4, _SUBLANES, _LANES),
                                       jnp.float32),
        grid_spec=pltpu.PrefetchScalarGridSpec(
            num_scalar_prefetch=0,
            grid=(_NUM_SPLITS, steps_per_split),
            in_specs=[in_spec, in_spec],
            out_specs=pl.BlockSpec((1, 4, _SUBLANES, _LANES),
                                   lambda c, i: (c, 0, 0, 0)),
            scratch_shapes=[pltpu.VMEM((_SUBLANES, _LANES), jnp.float32)] * 4,
        ),
        compiler_params=pltpu.CompilerParams(
            dimension_semantics=("parallel", "arbitrary"),
            vmem_limit_bytes=32 * 1024 * 1024,
        ),
    )(yp2, yt2)

    totals = jnp.sum(partials, axis=(0, 2, 3))  # (4,) tiny final reduction
    sum_pos, cnt_pos = totals[0], totals[1]
    sum_neg, cnt_neg = totals[2], totals[3]
    # torch.mean of an empty tensor is NaN -> 0/0 reproduces that.
    mean_pos = sum_pos / cnt_pos
    mean_neg = sum_neg / cnt_neg
    # if not mask.any(): loss = mean_neg  else: mean_pos + mean_neg
    return jnp.where(cnt_pos > 0.0, mean_pos + mean_neg, mean_neg)


def _reference(y_pred, y_true):
    """Pure-JAX reference mirroring the PyTorch module."""
    yt = jnp.ravel(y_true).astype(jnp.float32)
    yp = jnp.clip(jnp.ravel(y_pred).astype(jnp.float32), _EPS, 1.0 - _EPS)
    losses = -(yt * jnp.log(yp) + (1.0 - yt) * jnp.log(1.0 - yp))
    pos = (yt >= 0.5).astype(jnp.float32)
    neg = (yt < 0.5).astype(jnp.float32)
    mean_pos = jnp.sum(losses * pos) / jnp.sum(pos)
    mean_neg = jnp.sum(losses * neg) / jnp.sum(neg)
    return jnp.where(jnp.sum(pos) > 0.0, mean_pos + mean_neg, mean_neg)


if __name__ == "__main__":
    key = jax.random.PRNGKey(0)
    k1, k2, k3, k4 = jax.random.split(key, 4)

    # Case 1: standard NCHW input, mixed pos/neg targets.
    shape = (2, 4, 16, 16)
    y_pred = jax.random.uniform(k1, shape, jnp.float32, 1e-4, 1.0 - 1e-4)
    y_true = (jax.random.uniform(k2, shape, jnp.float32) > 0.7).astype(jnp.float32)
    loss = jax.block_until_ready(cross_entropy_cut(y_pred, y_true))
    ref = jax.block_until_ready(_reference(y_pred, y_true))
    assert jnp.allclose(loss, ref, rtol=1e-5, atol=1e-5), (loss, ref)

    # Case 2: ragged flat size (not a multiple of 128) exercises the tail mask.
    shape2 = (3, 5, 7, 11)
    yp2 = jax.random.uniform(k3, shape2, jnp.float32, 1e-4, 1.0 - 1e-4)
    yt2 = (jax.random.uniform(k4, shape2, jnp.float32) > 0.4).astype(jnp.float32)
    loss2 = jax.block_until_ready(cross_entropy_cut(yp2, yt2))
    ref2 = jax.block_until_ready(_reference(yp2, yt2))
    assert jnp.allclose(loss2, ref2, rtol=1e-5, atol=1e-5), (loss2, ref2)

    # Case 3: no positive targets -> loss = mean over negatives only.
    yt3 = jnp.zeros(shape, jnp.float32)
    loss3 = jax.block_until_ready(cross_entropy_cut(y_pred, yt3))
    ref3 = jax.block_until_ready(_reference(y_pred, yt3))
    assert jnp.allclose(loss3, ref3, rtol=1e-5, atol=1e-5), (loss3, ref3)

    print("KERNEL_OK")
</pallas_src>

<mosaic_0001>
module attributes {stable_mosaic.version = 11 : i64} {
  func.func @_ce_cut_kernel(%arg0: i32, %arg1: i32, %arg2: memref<16x128xf32, #tpu.memory_space<vmem>>, %arg3: memref<16x128xf32, #tpu.memory_space<vmem>>, %arg4: memref<1x4x8x128xf32, #tpu.memory_space<vmem>>, %arg5: memref<8x128xf32, #tpu.memory_space<vmem>>, %arg6: memref<8x128xf32, #tpu.memory_space<vmem>>, %arg7: memref<8x128xf32, #tpu.memory_space<vmem>>, %arg8: memref<8x128xf32, #tpu.memory_space<vmem>>) attributes {dimension_semantics = [#tpu.dimension_semantics<parallel>, #tpu.dimension_semantics<arbitrary>], iteration_bounds = array<i64: 2, 1>, scalar_prefetch = 0 : i64, scratch_operands = 4 : i64, tpu.core_type = #tpu.core_type<tc>, window_params = [{transform_indices = @transform_0, window_bounds = array<i64: 16, 128>}, {transform_indices = @transform_1, window_bounds = array<i64: 16, 128>}, {transform_indices = @transform_2, window_bounds = array<i64: 1, 4, 8, 128>}]} {
    %c0_i32 = arith.constant 0 : i32
    %0 = arith.cmpi eq, %arg1, %c0_i32 : i32
    %1 = arith.extui %0 : i1 to i32
    %c0_i32_0 = arith.constant 0 : i32
    %2 = arith.cmpi ne, %1, %c0_i32_0 : i32
    scf.if %2 {
      %cst_35 = arith.constant 0.000000e+00 : f32
      %68 = vector.broadcast %cst_35 : f32 to vector<8x128xf32>
      %c0_36 = arith.constant 0 : index
      %c0_37 = arith.constant 0 : index
      %69 = vector.load %arg5[%c0_36, %c0_37] : memref<8x128xf32, #tpu.memory_space<vmem>>, vector<8x128xf32>
      tpu.vector_store %arg5[%c0_36, %c0_37], %68 {strides = array<i32>} : memref<8x128xf32, #tpu.memory_space<vmem>>, vector<8x128xf32>,
      %cst_38 = arith.constant 0.000000e+00 : f32
      %70 = vector.broadcast %cst_38 : f32 to vector<8x128xf32>
      %c0_39 = arith.constant 0 : index
      %c0_40 = arith.constant 0 : index
      %71 = vector.load %arg6[%c0_39, %c0_40] : memref<8x128xf32, #tpu.memory_space<vmem>>, vector<8x128xf32>
      tpu.vector_store %arg6[%c0_39, %c0_40], %70 {strides = array<i32>} : memref<8x128xf32, #tpu.memory_space<vmem>>, vector<8x128xf32>,
      %cst_41 = arith.constant 0.000000e+00 : f32
      %72 = vector.broadcast %cst_41 : f32 to vector<8x128xf32>
      %c0_42 = arith.constant 0 : index
      %c0_43 = arith.constant 0 : index
      %73 = vector.load %arg7[%c0_42, %c0_43] : memref<8x128xf32, #tpu.memory_space<vmem>>, vector<8x128xf32>
      tpu.vector_store %arg7[%c0_42, %c0_43], %72 {strides = array<i32>} : memref<8x128xf32, #tpu.memory_space<vmem>>, vector<8x128xf32>,
      %cst_44 = arith.constant 0.000000e+00 : f32
      %74 = vector.broadcast %cst_44 : f32 to vector<8x128xf32>
      %c0_45 = arith.constant 0 : index
      %c0_46 = arith.constant 0 : index
      %75 = vector.load %arg8[%c0_45, %c0_46] : memref<8x128xf32, #tpu.memory_space<vmem>>, vector<8x128xf32>
      tpu.vector_store %arg8[%c0_45, %c0_46], %74 {strides = array<i32>} : memref<8x128xf32, #tpu.memory_space<vmem>>, vector<8x128xf32>,
    } else {
    }
    %c1_i32 = arith.constant 1 : i32
    %3 = arith.muli %arg0, %c1_i32 : i32
    %4 = arith.addi %3, %arg1 : i32
    %c16_i32 = arith.constant 16 : i32
    %5 = arith.muli %4, %c16_i32 : i32
    %6 = tpu.iota {dimensions = array<i32: 0>} : vector<16x128xi32>
    %c128_i32 = arith.constant 128 : i32
    %7 = vector.broadcast %c128_i32 : i32 to vector<16x128xi32>
    %8 = arith.muli %6, %7 : vector<16x128xi32>
    %9 = tpu.iota {dimensions = array<i32: 1>} : vector<16x128xi32>
    %10 = arith.addi %8, %9 : vector<16x128xi32>
    %c128_i32_1 = arith.constant 128 : i32
    %11 = arith.muli %5, %c128_i32_1 : i32
    %c2048_i32 = arith.constant 2048 : i32
    %12 = arith.subi %c2048_i32, %11 : i32
    %13 = vector.broadcast %12 : i32 to vector<16x128xi32>
    %14 = arith.cmpi slt, %10, %13 : vector<16x128xi32>
    %c0 = arith.constant 0 : index
    %c0_2 = arith.constant 0 : index
    %15 = vector.load %arg2[%c0, %c0_2] : memref<16x128xf32, #tpu.memory_space<vmem>>, vector<16x128xf32>
    %c0_3 = arith.constant 0 : index
    %c0_4 = arith.constant 0 : index
    %16 = vector.load %arg3[%c0_3, %c0_4] : memref<16x128xf32, #tpu.memory_space<vmem>>, vector<16x128xf32>
    %cst = arith.constant 5.000000e-01 : f32
    %17 = vector.broadcast %cst : f32 to vector<16x128xf32>
    %18 = arith.select %14, %15, %17 : vector<16x128xi1>, vector<16x128xf32>
    %cst_5 = arith.constant 0.000000e+00 : f32
    %19 = vector.broadcast %cst_5 : f32 to vector<16x128xf32>
    %20 = arith.select %14, %16, %19 : vector<16x128xi1>, vector<16x128xf32>
    %cst_6 = arith.constant 1.000000e-07 : f32
    %cst_7 = arith.constant 0.99999988 : f32
    %21 = vector.broadcast %cst_6 : f32 to vector<16x128xf32>
    %22 = arith.maximumf %21, %18 : vector<16x128xf32>
    %23 = vector.broadcast %cst_7 : f32 to vector<16x128xf32>
    %24 = arith.minimumf %23, %22 : vector<16x128xf32>
    %25 = math.log %24 : vector<16x128xf32>
    %26 = arith.mulf %20, %25 : vector<16x128xf32>
    %cst_8 = arith.constant 1.000000e+00 : f32
    %27 = vector.broadcast %cst_8 : f32 to vector<16x128xf32>
    %28 = arith.subf %27, %20 : vector<16x128xf32>
    %cst_9 = arith.constant 1.000000e+00 : f32
    %29 = vector.broadcast %cst_9 : f32 to vector<16x128xf32>
    %30 = arith.subf %29, %24 : vector<16x128xf32>
    %31 = math.log %30 : vector<16x128xf32>
    %32 = arith.mulf %28, %31 : vector<16x128xf32>
    %33 = arith.addf %26, %32 : vector<16x128xf32>
    %cst_10 = arith.constant 0.000000e+00 : f32
    %34 = vector.broadcast %cst_10 : f32 to vector<16x128xf32>
    %35 = arith.subf %34, %33 : vector<16x128xf32>
    %36 = arith.extui %14 : vector<16x128xi1> to vector<16x128xi32>
    %37 = arith.sitofp %36 : vector<16x128xi32> to vector<16x128xf32>
    %cst_11 = arith.constant 5.000000e-01 : f32
    %38 = vector.broadcast %cst_11 : f32 to vector<16x128xf32>
    %39 = arith.cmpf oge, %20, %38 : vector<16x128xf32>
    %cst_12 = arith.constant 0.000000e+00 : f32
    %40 = vector.broadcast %cst_12 : f32 to vector<16x128xf32>
    %41 = arith.select %39, %37, %40 : vector<16x128xi1>, vector<16x128xf32>
    %42 = arith.subf %37, %41 : vector<16x128xf32>
    %c0_13 = arith.constant 0 : index
    %c0_14 = arith.constant 0 : index
    %43 = vector.load %arg5[%c0_13, %c0_14] : memref<8x128xf32, #tpu.memory_space<vmem>>, vector<8x128xf32>
    %44 = arith.mulf %35, %41 : vector<16x128xf32>
    %45 = vector.shape_cast %44 : vector<16x128xf32> to vector<2x8x128xf32>
    %cst_15 = arith.constant dense<0.000000e+00> : vector<8x128xf32>
    %46 = vector.multi_reduction <add>, %45, %cst_15 [0] : vector<2x8x128xf32> to vector<8x128xf32>
    %47 = arith.addf %43, %46 : vector<8x128xf32>
    %c0_16 = arith.constant 0 : index
    %c0_17 = arith.constant 0 : index
    %48 = vector.load %arg5[%c0_16, %c0_17] : memref<8x128xf32, #tpu.memory_space<vmem>>, vector<8x128xf32>
    tpu.vector_store %arg5[%c0_16, %c0_17], %47 {strides = array<i32>} : memref<8x128xf32, #tpu.memory_space<vmem>>, vector<8x128xf32>,
    %c0_18 = arith.constant 0 : index
    %c0_19 = arith.constant 0 : index
    %49 = vector.load %arg6[%c0_18, %c0_19] : memref<8x128xf32, #tpu.memory_space<vmem>>, vector<8x128xf32>
    %50 = vector.shape_cast %41 : vector<16x128xf32> to vector<2x8x128xf32>
    %cst_20 = arith.constant dense<0.000000e+00> : vector<8x128xf32>
    %51 = vector.multi_reduction <add>, %50, %cst_20 [0] : vector<2x8x128xf32> to vector<8x128xf32>
    %52 = arith.addf %49, %51 : vector<8x128xf32>
    %c0_21 = arith.constant 0 : index
    %c0_22 = arith.constant 0 : index
    %53 = vector.load %arg6[%c0_21, %c0_22] : memref<8x128xf32, #tpu.memory_space<vmem>>, vector<8x128xf32>
    tpu.vector_store %arg6[%c0_21, %c0_22], %52 {strides = array<i32>} : memref<8x128xf32, #tpu.memory_space<vmem>>, vector<8x128xf32>,
    %c0_23 = arith.constant 0 : index
    %c0_24 = arith.constant 0 : index
    %54 = vector.load %arg7[%c0_23, %c0_24] : memref<8x128xf32, #tpu.memory_space<vmem>>, vector<8x128xf32>
    %55 = arith.mulf %35, %42 : vector<16x128xf32>
    %56 = vector.shape_cast %55 : vector<16x128xf32> to vector<2x8x128xf32>
    %cst_25 = arith.constant dense<0.000000e+00> : vector<8x128xf32>
    %57 = vector.multi_reduction <add>, %56, %cst_25 [0] : vector<2x8x128xf32> to vector<8x128xf32>
    %58 = arith.addf %54, %57 : vector<8x128xf32>
    %c0_26 = arith.constant 0 : index
    %c0_27 = arith.constant 0 : index
    %59 = vector.load %arg7[%c0_26, %c0_27] : memref<8x128xf32, #tpu.memory_space<vmem>>, vector<8x128xf32>
    tpu.vector_store %arg7[%c0_26, %c0_27], %58 {strides = array<i32>} : memref<8x128xf32, #tpu.memory_space<vmem>>, vector<8x128xf32>,
    %c0_28 = arith.constant 0 : index
    %c0_29 = arith.constant 0 : index
    %60 = vector.load %arg8[%c0_28, %c0_29] : memref<8x128xf32, #tpu.memory_space<vmem>>, vector<8x128xf32>
    %61 = vector.shape_cast %42 : vector<16x128xf32> to vector<2x8x128xf32>
    %cst_30 = arith.constant dense<0.000000e+00> : vector<8x128xf32>
    %62 = vector.multi_reduction <add>, %61, %cst_30 [0] : vector<2x8x128xf32> to vector<8x128xf32>
    %63 = arith.addf %60, %62 : vector<8x128xf32>
    %c0_31 = arith.constant 0 : index
    %c0_32 = arith.constant 0 : index
    %64 = vector.load %arg8[%c0_31, %c0_32] : memref<8x128xf32, #tpu.memory_space<vmem>>, vector<8x128xf32>
    tpu.vector_store %arg8[%c0_31, %c0_32], %63 {strides = array<i32>} : memref<8x128xf32, #tpu.memory_space<vmem>>, vector<8x128xf32>,
    %c0_i32_33 = arith.constant 0 : i32
    %65 = arith.cmpi eq, %arg1, %c0_i32_33 : i32
    %66 = arith.extui %65 : i1 to i32
    %c0_i32_34 = arith.constant 0 : i32
    %67 = arith.cmpi ne, %66, %c0_i32_34 : i32
    scf.if %67 {
      %c0_35 = arith.constant 0 : index
      %c0_36 = arith.constant 0 : index
      %68 = vector.load %arg5[%c0_35, %c0_36] : memref<8x128xf32, #tpu.memory_space<vmem>>, vector<8x128xf32>
      %c0_37 = arith.constant 0 : index
      %c0_38 = arith.constant 0 : index
      %c0_39 = arith.constant 0 : index
      %c0_40 = arith.constant 0 : index
      %69 = vector.load %arg4[%c0_37, %c0_38, %c0_39, %c0_40] : memref<1x4x8x128xf32, #tpu.memory_space<vmem>>, vector<1x1x8x128xf32>
      %70 = vector.shape_cast %69 : vector<1x1x8x128xf32> to vector<8x128xf32>
      %71 = vector.shape_cast %68 : vector<8x128xf32> to vector<1x1x8x128xf32>
      tpu.vector_store %arg4[%c0_37, %c0_38, %c0_39, %c0_40], %71 {strides = array<i32>} : memref<1x4x8x128xf32, #tpu.memory_space<vmem>>, vector<1x1x8x128xf32>,
      %c0_41 = arith.constant 0 : index
      %c0_42 = arith.constant 0 : index
      %72 = vector.load %arg6[%c0_41, %c0_42] : memref<8x128xf32, #tpu.memory_space<vmem>>, vector<8x128xf32>
      %c0_43 = arith.constant 0 : index
      %c1 = arith.constant 1 : index
      %c0_44 = arith.constant 0 : index
      %c0_45 = arith.constant 0 : index
      %73 = vector.load %arg4[%c0_43, %c1, %c0_44, %c0_45] : memref<1x4x8x128xf32, #tpu.memory_space<vmem>>, vector<1x1x8x128xf32>
      %74 = vector.shape_cast %73 : vector<1x1x8x128xf32> to vector<8x128xf32>
      %75 = vector.shape_cast %72 : vector<8x128xf32> to vector<1x1x8x128xf32>
      tpu.vector_store %arg4[%c0_43, %c1, %c0_44, %c0_45], %75 {strides = array<i32>} : memref<1x4x8x128xf32, #tpu.memory_space<vmem>>, vector<1x1x8x128xf32>,
      %c0_46 = arith.constant 0 : index
      %c0_47 = arith.constant 0 : index
      %76 = vector.load %arg7[%c0_46, %c0_47] : memref<8x128xf32, #tpu.memory_space<vmem>>, vector<8x128xf32>
      %c0_48 = arith.constant 0 : index
      %c2 = arith.constant 2 : index
      %c0_49 = arith.constant 0 : index
      %c0_50 = arith.constant 0 : index
      %77 = vector.load %arg4[%c0_48, %c2, %c0_49, %c0_50] : memref<1x4x8x128xf32, #tpu.memory_space<vmem>>, vector<1x1x8x128xf32>
      %78 = vector.shape_cast %77 : vector<1x1x8x128xf32> to vector<8x128xf32>
      %79 = vector.shape_cast %76 : vector<8x128xf32> to vector<1x1x8x128xf32>
      tpu.vector_store %arg4[%c0_48, %c2, %c0_49, %c0_50], %79 {strides = array<i32>} : memref<1x4x8x128xf32, #tpu.memory_space<vmem>>, vector<1x1x8x128xf32>,
      %c0_51 = arith.constant 0 : index
      %c0_52 = arith.constant 0 : index
      %80 = vector.load %arg8[%c0_51, %c0_52] : memref<8x128xf32, #tpu.memory_space<vmem>>, vector<8x128xf32>
      %c0_53 = arith.constant 0 : index
      %c3 = arith.constant 3 : index
      %c0_54 = arith.constant 0 : index
      %c0_55 = arith.constant 0 : index
      %81 = vector.load %arg4[%c0_53, %c3, %c0_54, %c0_55] : memref<1x4x8x128xf32, #tpu.memory_space<vmem>>, vector<1x1x8x128xf32>
      %82 = vector.shape_cast %81 : vector<1x1x8x128xf32> to vector<8x128xf32>
      %83 = vector.shape_cast %80 : vector<8x128xf32> to vector<1x1x8x128xf32>
      tpu.vector_store %arg4[%c0_53, %c3, %c0_54, %c0_55], %83 {strides = array<i32>} : memref<1x4x8x128xf32, #tpu.memory_space<vmem>>, vector<1x1x8x128xf32>,
    } else {
    }
    return
  }
  func.func @transform_0(%arg0: i32, %arg1: i32) -> (i32, i32) {
    %c1_i32 = arith.constant 1 : i32
    %0 = arith.muli %arg0, %c1_i32 : i32
    %1 = arith.addi %0, %arg1 : i32
    %c0_i32 = arith.constant 0 : i32
    %2 = arith.minsi %1, %c0_i32 : i32
    %c0_i32_0 = arith.constant 0 : i32
    %c0_i32_1 = arith.constant 0 : i32
    return %2, %c0_i32_0 : i32, i32
  }
  func.func @transform_1(%arg0: i32, %arg1: i32) -> (i32, i32) {
    %c1_i32 = arith.constant 1 : i32
    %0 = arith.muli %arg0, %c1_i32 : i32
    %1 = arith.addi %0, %arg1 : i32
    %c0_i32 = arith.constant 0 : i32
    %2 = arith.minsi %1, %c0_i32 : i32
    %c0_i32_0 = arith.constant 0 : i32
    %c0_i32_1 = arith.constant 0 : i32
    return %2, %c0_i32_0 : i32, i32
  }
  func.func @transform_2(%arg0: i32, %arg1: i32) -> (i32, i32, i32, i32) {
    %c0_i32 = arith.constant 0 : i32
    %c0_i32_0 = arith.constant 0 : i32
    %c0_i32_1 = arith.constant 0 : i32
    %c0_i32_2 = arith.constant 0 : i32
    return %arg0, %c0_i32, %c0_i32_0, %c0_i32_1 : i32, i32, i32, i32
  }
}

</mosaic_0001>

<llo_original>
// kernel: cross_entropy_cut.1
$region0: #{cross_entropy_cut.1}
  #allocation0 [shape = 'u32[]', space=smem, size = 0x4, offset = 0x4, fixed_abs, tag = 'smem constant byte address 0x4 - core index']
  #allocation1 [shape = 'u32[72,128]{1,0:T(1,128)}', space=vmem, size = 0x9000, scoped, tag = 'internal scratch']
  #allocation2 [shape = 'f32[8,128]{1,0:T(8,128)}', space=vmem, size = 0x1000, scoped, tag = 'scratch operand']
  #allocation3 [shape = 'f32[8,128]{1,0:T(8,128)}', space=vmem, size = 0x1000, scoped, tag = 'scratch operand']
  #allocation4 [shape = 'f32[8,128]{1,0:T(8,128)}', space=vmem, size = 0x1000, scoped, tag = 'scratch operand']
  #allocation5 [shape = 'f32[8,128]{1,0:T(8,128)}', space=vmem, size = 0x1000, scoped, tag = 'scratch operand']
  %s0 = inlined_call_operand.vmem [shape: f32[16,128], index: 0, kind: input, shape index: {}]
  %s1 = inlined_call_operand.vmem [shape: f32[16,128], index: 1, kind: input, shape index: {}]
  %s2 = inlined_call_operand.vmem [shape: f32[2,4,8,128], index: 2, kind: output, shape index: {}]
  %s3 = sld [smem:[#allocation0]]
  $region49: #{cross_entropy_cut.1} parent=0
    _
  %s5 = ssub.s32 1, %s3
  %s6 = scalar_select 0, %s5, %s3
  loop: start=0, step=1, limit=4
  $region2: #{cross_entropy_cut.1} parent=0 // loop_pre_header
    _
  $region3: #{cross_entropy_cut.1} parent=0 // loop_header
    %s8 = sphi 0, %s12
    %p9 = scmp.ge.s32.totalorder %s8, 4
    %s15 = sphi 0, %s27
    %s16 = sphi 0, %s23
    %s17 = sphi 0, %s15
    %s18 = sphi 0, %s16
    %s19 = sphi 0, %s17
    %s20 = sphi 0, %s18
    %s36 = sphi 0, %s38
    %s39 = sphi 0, %s36
    %s40 = sphi 0, %s39
    %s56 = sphi 0, %s40
    %s68 = sphi 0, %s70
    %s71 = sphi 0, %s68
    %s72 = sphi 0, %s71
    %s88 = sphi 0, %s72
    %s94 = sphi 0, %s96
    %s97 = sphi 0, %s94
    %s98 = sphi 0, %s97
    %s114 = sphi 0, %s98
  $region4: #{cross_entropy_cut.1} parent=0 // loop_header_branch
    %11 = sbr.rel (%p9) target = $region8
  $region5: #{cross_entropy_cut.1} parent=0 // loop_body
    %s13 = ssub.s32 %s8, 1
    %s14 = ssub.s32 %s8, 2
    %s21 = sadd.s32 1, %s16
    %p22 = scmp.ge.s32.totalorder %s21, 1
    %s23 = scalar_select %p22, 0, %s21
    %s24 = sadd.s32 1, %s15
    %s25 = scalar_select %p22, %s24, %s15
    %p26 = scmp.ge.s32.totalorder %s25, 2
    %s27 = scalar_select %p26, 0, %s25
    %s28 = sadd.s32 %s15, %s16
    %p29 = scmp.lt.s32.totalorder %s28, 0
    %s30 = scalar_select %p29, %s28, 0
    %s31 = sadd.s32 %s27, %s23
    %p32 = scmp.lt.s32.totalorder %s31, 0
    %s33 = scalar_select %p32, %s31, 0
    %s34 = ssub.s32 %s30, %s33
    %p35 = scmp.eq.s32.totalorder %s34, 0
    %s37 = sadd.s32 %s36, 1
    %s38 = scalar_select %p35, %s36, %s37
    %p41 = pneg %p35
    %p42 = scmp.eq.s32.totalorder %s8, 1
    %p43 = por %p41, %p42
    %p44 = scmp.ne.s32.totalorder %s36, %s39
    %p45 = scmp.eq.s32.totalorder %s8, 0
    %p46 = por %p44, %p45
    %p47 = scmp.ne.s32.totalorder %s36, %s39
    %p48 = scmp.eq.s32.totalorder %s13, 1
    %p49 = por %p47, %p48
    %p50 = scmp.ne.s32.totalorder %s39, %s40
    %p51 = scmp.eq.s32.totalorder %s13, 0
    %p52 = por %p50, %p51
    %p53 = scmp.ne.s32.totalorder %s39, %s40
    %p54 = scmp.eq.s32.totalorder %s14, 1
    %p55 = por %p53, %p54
    %p57 = scmp.ne.s32.totalorder %s40, %s56
    %p58 = scmp.eq.s32.totalorder %s14, 0
    %p59 = por %p57, %p58
    %s60 = sadd.s32 %s15, %s16
    %p61 = scmp.lt.s32.totalorder %s60, 0
    %s62 = scalar_select %p61, %s60, 0
    %s63 = sadd.s32 %s27, %s23
    %p64 = scmp.lt.s32.totalorder %s63, 0
    %s65 = scalar_select %p64, %s63, 0
    %s66 = ssub.s32 %s62, %s65
    %p67 = scmp.eq.s32.totalorder %s66, 0
    %s69 = sadd.s32 %s68, 1
    %s70 = scalar_select %p67, %s68, %s69
    %p73 = pneg %p67
    %p74 = scmp.eq.s32.totalorder %s8, 1
    %p75 = por %p73, %p74
    %p76 = scmp.ne.s32.totalorder %s68, %s71
    %p77 = scmp.eq.s32.totalorder %s8, 0
    %p78 = por %p76, %p77
    %p79 = scmp.ne.s32.totalorder %s68, %s71
    %p80 = scmp.eq.s32.totalorder %s13, 1
    %p81 = por %p79, %p80
    %p82 = scmp.ne.s32.totalorder %s71, %s72
    %p83 = scmp.eq.s32.totalorder %s13, 0
    %p84 = por %p82, %p83
    %p85 = scmp.ne.s32.totalorder %s71, %s72
    %p86 = scmp.eq.s32.totalorder %s14, 1
    %p87 = por %p85, %p86
    %p89 = scmp.ne.s32.totalorder %s72, %s88
    %p90 = scmp.eq.s32.totalorder %s14, 0
    %p91 = por %p89, %p90
    %s92 = ssub.s32 %s15, %s27
    %p93 = scmp.eq.s32.totalorder %s92, 0
    %s95 = sadd.s32 %s94, 1
    %s96 = scalar_select %p93, %s94, %s95
    %p99 = pneg %p93
    %p100 = scmp.eq.s32.totalorder %s8, 1
    %p101 = por %p99, %p100
    %p102 = scmp.ne.s32.totalorder %s94, %s97
    %p103 = scmp.eq.s32.totalorder %s8, 0
    %p104 = por %p102, %p103
    %p105 = scmp.ne.s32.totalorder %s94, %s97
    %p106 = scmp.eq.s32.totalorder %s13, 1
    %p107 = por %p105, %p106
    %p108 = scmp.ne.s32.totalorder %s97, %s98
    %p109 = scmp.eq.s32.totalorder %s13, 0
    %p110 = por %p108, %p109
    %p111 = scmp.ne.s32.totalorder %s97, %s98
    %p112 = scmp.eq.s32.totalorder %s14, 1
    %p113 = por %p111, %p112
    %p115 = scmp.ne.s32.totalorder %s98, %s114
    %p116 = scmp.eq.s32.totalorder %s14, 0
    %p117 = por %p115, %p116
    %p118 = scmp.le.s32.totalorder 1, %s8
    %p119 = scmp.lt.s32.totalorder %s8, 3
    %p120 = pnand %p118, %p119
    %p121 = pneg %p120
    // Predicated region
    $region9: #{cross_entropy_cut.1} parent=5 // pred_check
      _
    $region10: #{cross_entropy_cut.1} parent=5 // pred_check_branch
      %123 = sbr.rel (%p120) target = $region12
    $region11: #{cross_entropy_cut.1} parent=5 // pred_region
      %s124 = ssub.s32 %s8, 1
    $region12: #{cross_entropy_cut.1} parent=5 // pred_fallthru
      _
    %p125 = scmp.lt.s32.totalorder %s8, 2
    // Predicated region
    $region13: #{cross_entropy_cut.1} parent=5 // pred_check
      %p126 = pneg %p125
    $region14: #{cross_entropy_cut.1} parent=5 // pred_check_branch
      %128 = sbr.rel (%p126) target = $region16
    $region15: #{cross_entropy_cut.1} parent=5 // pred_region
      // Predicated region
      $region17: #{cross_entropy_cut.1} parent=15 // pred_check
        %p129 = pneg %p46
      $region18: #{cross_entropy_cut.1} parent=15 // pred_check_branch
        %131 = sbr.rel (%p129) target = $region20
      $region19: #{cross_entropy_cut.1} parent=15 // pred_region
        %s132 = sadd.s32 %s15, %s16
        %p133 = scmp.lt.s32.totalorder %s132, 0
        %s134 = scalar_select %p133, %s132, 0
        %s135 = smul.u32 2, %s134
        %p136 = scmp.lt.s32.totalorder %s135, 1
        %s137 = scalar_select %p136, %s135, 1
        %s138 = smul.addr %s137, 8
        %s139 = scalar_lea.vmem %s0, %s138
        %s140 = sadd.s32 %s15, %s16
        %p141 = scmp.lt.s32.totalorder %s140, 0
        %s142 = scalar_select %p141, %s140, 0
        %s143 = smul.u32 2, %s142
      $region20: #{cross_entropy_cut.1} parent=15 // pred_fallthru
        _
      // Predicated region
      $region21: #{cross_entropy_cut.1} parent=15 // pred_check
        %p144 = pneg %p78
      $region22: #{cross_entropy_cut.1} parent=15 // pred_check_branch
        %146 = sbr.rel (%p144) target = $region24
      $region23: #{cross_entropy_cut.1} parent=15 // pred_region
        %s147 = sadd.s32 %s15, %s16
        %p148 = scmp.lt.s32.totalorder %s147, 0
        %s149 = scalar_select %p148, %s147, 0
        %s150 = smul.u32 2, %s149
        %p151 = scmp.lt.s32.totalorder %s150, 1
        %s152 = scalar_select %p151, %s150, 1
        %s153 = smul.addr %s152, 8
        %s154 = scalar_lea.vmem %s1, %s153
        %s155 = sadd.s32 %s15, %s16
        %p156 = scmp.lt.s32.totalorder %s155, 0
        %s157 = scalar_select %p156, %s155, 0
        %s158 = smul.u32 2, %s157
      $region24: #{cross_entropy_cut.1} parent=15 // pred_fallthru
        _
    $region16: #{cross_entropy_cut.1} parent=5 // pred_fallthru
      _
    %p159 = scmp.le.s32.totalorder 1, %s8
    %p160 = scmp.lt.s32.totalorder %s8, 3
    %p161 = pnand %p159, %p160
    %p162 = pneg %p161
    // Predicated region
    $region25: #{cross_entropy_cut.1} parent=5 // pred_check
      _
    $region26: #{cross_entropy_cut.1} parent=5 // pred_check_branch
      %164 = sbr.rel (%p161) target = $region28
    $region27: #{cross_entropy_cut.1} parent=5 // pred_region
      %s165 = ssub.s32 %s8, 1
      %s166 = sadd.s32 %s17, %s18
      %p167 = scmp.lt.s32.totalorder %s166, 0
      %s168 = scalar_select %p167, %s166, 0
      %s169 = smul.u32 2, %s168
      %p170 = scmp.lt.s32.totalorder %s169, 1
      %s171 = scalar_select %p170, %s169, 1
      %s172 = smul.addr %s171, 8
      %s173 = scalar_lea.vmem %s0, %s172
      %p174 = pneg %p52
      %p175 = pneg %p49
      %s176 = sadd.s32 %s17, %s18
      %p177 = scmp.lt.s32.totalorder %s176, 0
      %s178 = scalar_select %p177, %s176, 0
      %s179 = smul.u32 2, %s178
      %p180 = scmp.lt.s32.totalorder %s179, 1
      %s181 = scalar_select %p180, %s179, 1
      %s182 = smul.addr %s181, 8
      %s183 = scalar_lea.vmem %s1, %s182
      %p184 = pneg %p84
      %p185 = pneg %p81
      %p186 = pneg %p110
      %p187 = pneg %p107
      %p188 = scmp.lt.s32.totalorder %s17, 1
      %s189 = scalar_select %p188, %s17, 1
      %s190 = smul.addr %s189, 4
      %s191 = smul.addr %s190, 8
      %s192 = scalar_lea.vmem %s2, %s191
      %s193 = sadd.s32 %s17, %s18
      %p194 = scmp.lt.s32.totalorder %s193, 0
      %s195 = scalar_select %p194, %s193, 0
      %s196 = smul.u32 2, %s195
      %p197 = scmp.lt.s32.totalorder %s196, 1
      %s198 = scalar_select %p197, %s196, 1
      %s199 = smul.addr %s198, 8
      %s200 = scalar_lea.vmem %s0, %s199
      %s201 = sadd.s32 %s17, %s18
      %p202 = scmp.lt.s32.totalorder %s201, 0
      %s203 = scalar_select %p202, %s201, 0
      %s204 = smul.u32 2, %s203
      %s205 = sadd.s32 %s17, %s18
      %p206 = scmp.lt.s32.totalorder %s205, 0
      %s207 = scalar_select %p206, %s205, 0
      %s208 = smul.u32 2, %s207
      %p209 = scmp.lt.s32.totalorder %s208, 1
      %s210 = scalar_select %p209, %s208, 1
      %s211 = smul.addr %s210, 8
      %s212 = scalar_lea.vmem %s1, %s211
      %s213 = sadd.s32 %s17, %s18
      %p214 = scmp.lt.s32.totalorder %s213, 0
      %s215 = scalar_select %p214, %s213, 0
      %s216 = smul.u32 2, %s215
      %p217 = scmp.lt.s32.totalorder %s17, 1
      %s218 = scalar_select %p217, %s17, 1
      %s219 = smul.addr %s218, 4
      %s220 = smul.addr %s219, 8
      %s221 = scalar_lea.vmem %s2, %s220
      %p222 = scmp.eq.s32.totalorder %s18, 0
      // Predicated region
      $region29: #{cross_entropy_cut.1} parent=27 // pred_check
        %p223 = pneg %p222
      $region30: #{cross_entropy_cut.1} parent=27 // pred_check_branch
        %225 = sbr.rel (%p223) target = $region32
      $region31: #{cross_entropy_cut.1} parent=27 // pred_region
        %226 = vst [vmem:[#allocation2] sm:$0xff] 0.0
        %227 = vst [vmem:[#allocation3] sm:$0xff] 0.0
        %228 = vst [vmem:[#allocation4] sm:$0xff] 0.0
        %229 = vst [vmem:[#allocation5] sm:$0xff] 0.0
      $region32: #{cross_entropy_cut.1} parent=27 // pred_fallthru
        _
      %s230 = sadd.s32 %s17, %s18
      %v231 = vlaneseq
      %v232 = vshrl.u32 %v231, 7
      %v233 = vadd.s32 %v232, 8
      %v234 = vmul.u32 %v232, 128
      %v235 = vmul.u32 %v233, 128
      %v236 = vlaneseq
      %v237 = vand.u32 %v236, 127
      %v238 = vadd.s32 %v234, %v237
      %v239 = vadd.s32 %v235, %v237
      %s240 = smul.u32 %s230, 2048
      %s241 = ssub.s32 2048, %s240
      %v242 = vstv %s241
      %vm243 = vcmp.lt.s32.totalorder %v238, %v242
      %vm244 = vcmp.lt.s32.totalorder %v239, %v242
      %v245 = vld [vmem:[%s200] sm:$0xff]
      %v246 = vld [vmem:[%s200 + $0x8] sm:$0xff]
      %v247 = vld [vmem:[%s212] sm:$0xff]
      %v248 = vld [vmem:[%s212 + $0x8] sm:$0xff]
      %v249 = vsel %vm243, %v245, 0.5
      %v250 = vsel %vm244, %v246, 0.5
      %v251 = vsel %vm243, %v247, 0.0
      %v252 = vsel %vm244, %v248, 0.0
      %v253 = vmax.f32 %v249, 1e-07
      %v254 = vmax.f32 %v250, 1e-07
      %v255 = vmin.f32 %v253, 0.9999999
      %v256 = vmin.f32 %v254, 0.9999999
      %v257 = vlog2.pop %v255
      %v258 = vmul.f32 %v257, 0.6931472
      %v259 = vlog2.pop %v256
      %v260 = vmul.f32 %v259, 0.6931472
      %v261 = vmul.f32 %v251, %v258
      %v262 = vmul.f32 %v252, %v260
      %v263 = vsub.f32 1.0, %v251
      %v264 = vsub.f32 1.0, %v252
      %v265 = vsub.f32 1.0, %v255
      %v266 = vsub.f32 1.0, %v256
      %v267 = vlog2.pop %v265
      %v268 = vmul.f32 %v267, 0.6931472
      %v269 = vlog2.pop %v266
      %v270 = vmul.f32 %v269, 0.6931472
      %v271 = vmul.f32 %v263, %v268
      %v272 = vmul.f32 %v264, %v270
      %v273 = vadd.f32 %v261, %v271
      %v274 = vadd.f32 %v262, %v272
      %v275 = vsub.f32 0.0, %v273
      %v276 = vsub.f32 0.0, %v274
      %v277 = vsel %vm243, 1, 0
      %v278 = vsel %vm244, 1, 0
      %v279 = vcvt.s32.f32 %v277
      %v280 = vcvt.s32.f32 %v278
      %vm281 = vcmp.ge.f32.partialorder %v251, 0.5
      %vm282 = vcmp.ge.f32.partialorder %v252, 0.5
      %v283 = vsel %vm281, %v279, 0.0
      %v284 = vsel %vm282, %v280, 0.0
      %v285 = vsub.f32 %v279, %v283
      %v286 = vsub.f32 %v280, %v284
      %v287 = vld [vmem:[#allocation2] sm:$0xff]
      %v288 = vmul.f32 %v275, %v283
      %v289 = vmul.f32 %v276, %v284
      %v290 = vadd.f32 %v288, %v289
      %v291 = vadd.f32 %v287, %v290
      %292 = vst [vmem:[#allocation2] sm:$0xff] %v291
      %v293 = vld [vmem:[#allocation3] sm:$0xff]
      %v294 = vadd.f32 %v283, %v284
      %v295 = vadd.f32 %v293, %v294
      %296 = vst [vmem:[#allocation3] sm:$0xff] %v295
      %v297 = vld [vmem:[#allocation4] sm:$0xff]
      %v298 = vmul.f32 %v275, %v285
      %v299 = vmul.f32 %v276, %v286
      %v300 = vadd.f32 %v298, %v299
      %v301 = vadd.f32 %v297, %v300
      %302 = vst [vmem:[#allocation4] sm:$0xff] %v301
      %v303 = vld [vmem:[#allocation5] sm:$0xff]
      %v304 = vadd.f32 %v285, %v286
      %v305 = vadd.f32 %v303, %v304
      %306 = vst [vmem:[#allocation5] sm:$0xff] %v305
      // Predicated region
      $region33: #{cross_entropy_cut.1} parent=27 // pred_check
        %p307 = pneg %p222
      $region34: #{cross_entropy_cut.1} parent=27 // pred_check_branch
        %309 = sbr.rel (%p307) target = $region36
      $region35: #{cross_entropy_cut.1} parent=27 // pred_region
        %v310 = vld [vmem:[#allocation2] sm:$0xff]
        %311 = vst [vmem:[%s221] sm:$0xff] %v310
        %v312 = vld [vmem:[#allocation3] sm:$0xff]
        %s313 = scalar_lea.vmem %s221, 8
        %314 = vst [vmem:[%s313] sm:$0xff] %v312
        %v315 = vld [vmem:[#allocation4] sm:$0xff]
        %s316 = scalar_lea.vmem %s221, 16
        %317 = vst [vmem:[%s316] sm:$0xff] %v315
        %v318 = vld [vmem:[#allocation5] sm:$0xff]
        %s319 = scalar_lea.vmem %s221, 24
        %320 = vst [vmem:[%s319] sm:$0xff] %v318
      $region36: #{cross_entropy_cut.1} parent=27 // pred_fallthru
        _
      %p321 = scmp.lt.s32.totalorder %s17, 1
      %s322 = scalar_select %p321, %s17, 1
      %s323 = smul.addr %s322, 4
      %s324 = smul.addr %s323, 8
      %s325 = scalar_lea.vmem %s2, %s324
      // Predicated region
      $region37: #{cross_entropy_cut.1} parent=27 // pred_check
        %p326 = pneg %p107
      $region38: #{cross_entropy_cut.1} parent=27 // pred_check_branch
        %328 = sbr.rel (%p326) target = $region40
      $region39: #{cross_entropy_cut.1} parent=27 // pred_region
        _
      $region40: #{cross_entropy_cut.1} parent=27 // pred_fallthru
        _
    $region28: #{cross_entropy_cut.1} parent=5 // pred_fallthru
      _
    %p329 = scmp.le.s32.totalorder 2, %s8
    // Predicated region
    $region41: #{cross_entropy_cut.1} parent=5 // pred_check
      %p330 = pneg %p329
    $region42: #{cross_entropy_cut.1} parent=5 // pred_check_branch
      %332 = sbr.rel (%p330) target = $region44
    $region43: #{cross_entropy_cut.1} parent=5 // pred_region
      %s333 = ssub.s32 %s8, 2
      // Predicated region
      $region45: #{cross_entropy_cut.1} parent=43 // pred_check
        %p334 = pneg %p113
      $region46: #{cross_entropy_cut.1} parent=43 // pred_check_branch
        %336 = sbr.rel (%p334) target = $region48
      $region47: #{cross_entropy_cut.1} parent=43 // pred_region
        %p337 = scmp.lt.s32.totalorder %s19, 1
        %s338 = scalar_select %p337, %s19, 1
        %s339 = smul.addr %s338, 4
        %s340 = smul.addr %s339, 8
        %s341 = scalar_lea.vmem %s2, %s340
      $region48: #{cross_entropy_cut.1} parent=43 // pred_fallthru
        _
    $region44: #{cross_entropy_cut.1} parent=5 // pred_fallthru
      _
  $region6: #{cross_entropy_cut.1} parent=0 // loop_footer
    %s12 = sadd.s32 1, %s8
  $region7: #{cross_entropy_cut.1} parent=0 // loop_footer_branch
    %7 = sbr.rel target = $region3
  $region8: #{cross_entropy_cut.1} parent=0 // loop_exit
    _

</llo_original>
